<compile_context>
chip_gen: v7x
topology: tpu7x:2x2x1
jax: 0.10.0
libtpu: 0.0.40
codegen_flags: <defaults>
</compile_context>

<pallas_src>
import jax
import jax.numpy as jnp
from jax.experimental import pallas as pl
from jax.experimental.pallas import tpu as pltpu

_LANES = 128
_NEG_BIG = -1e30


def _round_up(x, m):
    return ((x + m - 1) // m) * m


# ---------------------------------------------------------------------------
# Kernels
# ---------------------------------------------------------------------------
def _graph_conv_kernel(a_ref, xk_ref, xi_ref, wr_ref, ws_ref, b_ref, y_ref, acc_ref):
    """One GraphConv (aggr='add') + ReLU, K-tiled over source nodes.

    a_ref : (TM, TK) bf16  weighted adjacency block, A[dst_tile, src_block]
    xk_ref: (TK, F)  bf16  source-node feature block (streamed over k)
    xi_ref: (TM, F)  bf16  dst row tile of the same features (root/self term)
    wr_ref: (F, H)   bf16  lin_rel weight
    ws_ref: (F, H)   bf16  lin_root weight
    b_ref : (1, H)   f32   lin_rel bias
    y_ref : (TM, H)  bf16  ReLU(GraphConv) output tile
    acc_ref:(TM, F)  f32   aggregation accumulator (VMEM scratch)
    """
    k = pl.program_id(1)

    @pl.when(k == 0)
    def _():
        acc_ref[...] = jnp.zeros_like(acc_ref)

    acc_ref[...] += jnp.dot(a_ref[...], xk_ref[...],
                            preferred_element_type=jnp.float32)

    @pl.when(k == pl.num_programs(1) - 1)
    def _():
        h = (jnp.dot(acc_ref[...].astype(jnp.bfloat16), wr_ref[...],
                     preferred_element_type=jnp.float32)
             + jnp.dot(xi_ref[...], ws_ref[...],
                       preferred_element_type=jnp.float32)
             + b_ref[...])
        y_ref[...] = jnp.maximum(h, 0.0).astype(y_ref.dtype)


def _conv3_head_kernel(a_ref, x2k_ref, x1i_ref, x2i_ref,
                       w3r_ref, w3s_ref, b3_ref,
                       wl1_ref, wl2_ref, wl3_ref, bl_ref,
                       out_ref, acc_ref):
    """Fused conv3 + (x1|x2|x3)@W_lin + log_softmax, K-tiled over source nodes.

    The Linear over the concat is three accumulating matmuls (no lane concat).
    Class dim is padded to 128 lanes; padded classes carry bias -1e30 so they
    vanish from the softmax.  All softmax math is f32 (v5e-safe; also keeps
    the -1e30 trick overflow-free).
    """
    k = pl.program_id(1)

    @pl.when(k == 0)
    def _():
        acc_ref[...] = jnp.zeros_like(acc_ref)

    acc_ref[...] += jnp.dot(a_ref[...], x2k_ref[...],
                            preferred_element_type=jnp.float32)

    @pl.when(k == pl.num_programs(1) - 1)
    def _():
        x3 = jnp.maximum(
            jnp.dot(acc_ref[...].astype(jnp.bfloat16), w3r_ref[...],
                    preferred_element_type=jnp.float32)
            + jnp.dot(x2i_ref[...], w3s_ref[...],
                      preferred_element_type=jnp.float32)
            + b3_ref[...],
            0.0)

        logits = (jnp.dot(x1i_ref[...], wl1_ref[...],
                          preferred_element_type=jnp.float32)
                  + jnp.dot(x2i_ref[...], wl2_ref[...],
                            preferred_element_type=jnp.float32)
                  + jnp.dot(x3.astype(jnp.bfloat16), wl3_ref[...],
                            preferred_element_type=jnp.float32)
                  + bl_ref[...])

        m = jnp.max(logits, axis=-1, keepdims=True)
        z = logits - m
        lse = jnp.log(jnp.sum(jnp.exp(z), axis=-1, keepdims=True))
        out_ref[...] = z - lse


# ---------------------------------------------------------------------------
# Tiling / device configuration
# ---------------------------------------------------------------------------
def _device_config():
    kind = ""
    try:
        kind = jax.devices()[0].device_kind.lower()
    except Exception:
        pass
    if "v7" in kind:
        # 64 MiB VMEM/TC: leave headroom; keep >= 8 row stripes for 2 TCs.
        return dict(vmem=48 * 1024 * 1024, tm=256, tk=2048, min_stripes=8)
    if "v6" in kind or "v5" in kind:
        # 128 MiB physical VMEM: bigger tiles amortize per-step overhead on the
        # bandwidth-bound A stream.
        return dict(vmem=96 * 1024 * 1024, tm=512, tk=4096, min_stripes=1)
    # Conservative default that fits every generation.
    return dict(vmem=48 * 1024 * 1024, tm=256, tk=2048, min_stripes=1)


def _pick_tm(n, tm_target, min_stripes):
    """Row-stripe size: multiple of 128, shrunk so there are >= min_stripes stripes."""
    n128 = _round_up(n, _LANES)
    tm = max(_LANES, min((tm_target // _LANES) * _LANES, n128))
    while tm > _LANES and (_round_up(n, tm) // tm) < min_stripes:
        tm -= _LANES
    return tm


def _pick_tk(n_pad, tk_target):
    """Source-block size: multiple of 128 that divides n_pad, close to tk_target."""
    units = n_pad // _LANES
    d_target = max(1, min(units, tk_target // _LANES))
    for d in range(d_target, 0, -1):
        if units % d == 0:
            return d * _LANES
    return _LANES


# ---------------------------------------------------------------------------
# Wrapper
# ---------------------------------------------------------------------------
def graphsaint_net_forward(a, x0, params, *, tm=None, tk=None, vmem_limit_bytes=None):
    """a: (N, N) f32 weighted adjacency. x0: (N, Fin) f32. params: f32 dict."""
    n, fin = x0.shape
    h = params["w1r"].shape[1]
    c = params["wl"].shape[1]

    cfg = _device_config()
    tm_target = tm if tm is not None else cfg["tm"]
    tk_target = tk if tk is not None else cfg["tk"]
    vmem = vmem_limit_bytes if vmem_limit_bytes is not None else cfg["vmem"]

    # ---- host-side layout prep: padding / dtype / weight split ------------
    tm = _pick_tm(n, tm_target, cfg["min_stripes"])
    n_pad = _round_up(n, tm)                 # multiple of tm (and of 128)
    tk = _pick_tk(n_pad, tk_target)          # multiple of 128, divides n_pad
    fin_pad = _round_up(fin, 8)
    c_pad = _round_up(c, _LANES)
    grid = (n_pad // tm, n_pad // tk)        # (row stripes, source blocks)

    bf16 = lambda t: t.astype(jnp.bfloat16)

    # NOTE: A cast to bf16 after duplicate-edge summation (accuracy note above).
    a_p = jnp.zeros((n_pad, n_pad), jnp.bfloat16).at[:n, :n].set(bf16(a))
    x0_p = jnp.zeros((n_pad, fin_pad), jnp.bfloat16).at[:n, :fin].set(bf16(x0))

    w1r = jnp.zeros((fin_pad, h), jnp.bfloat16).at[:fin].set(bf16(params["w1r"]))
    w1s = jnp.zeros((fin_pad, h), jnp.bfloat16).at[:fin].set(bf16(params["w1s"]))
    w2r, w2s = bf16(params["w2r"]), bf16(params["w2s"])
    w3r, w3s = bf16(params["w3r"]), bf16(params["w3s"])
    b1 = params["b1"].astype(jnp.float32)
    b2 = params["b2"].astype(jnp.float32)
    b3 = params["b3"].astype(jnp.float32)

    wl = params["wl"]  # (3H, C) -> split into three (H, C_pad) blocks
    wl1 = jnp.zeros((h, c_pad), jnp.bfloat16).at[:, :c].set(bf16(wl[0:h]))
    wl2 = jnp.zeros((h, c_pad), jnp.bfloat16).at[:, :c].set(bf16(wl[h:2 * h]))
    wl3 = jnp.zeros((h, c_pad), jnp.bfloat16).at[:, :c].set(bf16(wl[2 * h:3 * h]))
    bl = jnp.full((1, c_pad), _NEG_BIG, jnp.float32).at[:, :c].set(
        params["bl"].astype(jnp.float32))

    cparams = pltpu.CompilerParams(
        dimension_semantics=("parallel", "arbitrary"),
        vmem_limit_bytes=int(vmem),
    )

    def const_spec(shape):
        return pl.BlockSpec(shape, lambda i, k: (0,) * len(shape))

    def conv_layer(x_full, f_l, wr, ws, b):
        return pl.pallas_call(
            _graph_conv_kernel,
            grid=grid,
            in_specs=[
                pl.BlockSpec((tm, tk), lambda i, k: (i, k)),   # A block (streamed)
                pl.BlockSpec((tk, f_l), lambda i, k: (k, 0)),  # X source block
                pl.BlockSpec((tm, f_l), lambda i, k: (i, 0)),  # X dst tile (root term)
                const_spec((f_l, h)),                          # W_rel
                const_spec((f_l, h)),                          # W_root
                const_spec((1, h)),                            # bias
            ],
            out_specs=pl.BlockSpec((tm, h), lambda i, k: (i, 0)),
            out_shape=jax.ShapeDtypeStruct((n_pad, h), jnp.bfloat16),
            scratch_shapes=[pltpu.VMEM((tm, f_l), jnp.float32)],
            compiler_params=cparams,
        )(a_p, x_full, x_full, wr, ws, b)

    x1 = conv_layer(x0_p, fin_pad, w1r, w1s, b1)  # dropout(p=0.2, eval) = identity
    x2 = conv_layer(x1, h, w2r, w2s, b2)

    out_pad = pl.pallas_call(
        _conv3_head_kernel,
        grid=grid,
        in_specs=[
            pl.BlockSpec((tm, tk), lambda i, k: (i, k)),   # A block (streamed)
            pl.BlockSpec((tk, h), lambda i, k: (k, 0)),    # x2 source block
            pl.BlockSpec((tm, h), lambda i, k: (i, 0)),    # x1 dst tile
            pl.BlockSpec((tm, h), lambda i, k: (i, 0)),    # x2 dst tile (root + clf)
            const_spec((h, h)),                            # w3r
            const_spec((h, h)),                            # w3s
            const_spec((1, h)),                            # b3
            const_spec((h, c_pad)),                        # wl block for x1
            const_spec((h, c_pad)),                        # wl block for x2
            const_spec((h, c_pad)),                        # wl block for x3
            const_spec((1, c_pad)),                        # bl (padded classes = -1e30)
        ],
        out_specs=pl.BlockSpec((tm, c_pad), lambda i, k: (i, 0)),  # lane-dense
        out_shape=jax.ShapeDtypeStruct((n_pad, c_pad), jnp.float32),
        scratch_shapes=[pltpu.VMEM((tm, h), jnp.float32)],
        compiler_params=cparams,
    )(a_p, x2, x1, x2, w3r, w3s, b3, wl1, wl2, wl3, bl)

    return out_pad[:n, :c]


# ---------------------------------------------------------------------------
# Host-side helpers (glue, plain JAX)
# ---------------------------------------------------------------------------
def make_params(key, in_channels, hidden, num_classes):
    def dense(k, fan_in, fan_out):
        bound = 1.0 / jnp.sqrt(jnp.float32(fan_in))
        return jax.random.uniform(k, (fan_in, fan_out), jnp.float32, -bound, bound)

    keys = jax.random.split(key, 11)
    return {
        "w1r": dense(keys[0], in_channels, hidden),
        "w1s": dense(keys[1], in_channels, hidden),
        "b1":  jax.random.uniform(keys[2], (1, hidden), jnp.float32, -0.1, 0.1),
        "w2r": dense(keys[3], hidden, hidden),
        "w2s": dense(keys[4], hidden, hidden),
        "b2":  jax.random.uniform(keys[5], (1, hidden), jnp.float32, -0.1, 0.1),
        "w3r": dense(keys[6], hidden, hidden),
        "w3s": dense(keys[7], hidden, hidden),
        "b3":  jax.random.uniform(keys[8], (1, hidden), jnp.float32, -0.1, 0.1),
        "wl":  dense(keys[9], 3 * hidden, num_classes),
        "bl":  jax.random.uniform(keys[10], (1, num_classes), jnp.float32, -0.1, 0.1),
    }


def edges_to_dense_adj(edge_index, edge_weight, num_nodes):
    """A[dst, src] = sum of weights for that (src, dst) edge — PyG 'add' aggr."""
    # TODO(synk): for large/real GraphSAINT subgraphs (E << N^2) switch to a
    # CSR/block-sparse aggregation (PrefetchScalarGridSpec + gathered X blocks)
    # instead of the dense N x N adjacency; A traffic dominates the runtime.
    src, dst = edge_index[0], edge_index[1]
    a = jnp.zeros((num_nodes, num_nodes), jnp.float32)
    return a.at[dst, src].add(edge_weight)


def _reference_forward(a, x0, params):
    """Pure-JAX f32 reference of the PyTorch module (eval mode)."""
    def conv(x, wr, ws, b):
        return jax.nn.relu((a @ x) @ wr + x @ ws + b)
    x1 = conv(x0, params["w1r"], params["w1s"], params["b1"])
    x2 = conv(x1, params["w2r"], params["w2s"], params["b2"])
    x3 = conv(x2, params["w3r"], params["w3s"], params["b3"])
    cat = jnp.concatenate([x1, x2, x3], axis=-1)
    logits = cat @ params["wl"] + params["bl"]
    return jax.nn.log_softmax(logits, axis=-1)


if __name__ == "__main__":
    key = jax.random.PRNGKey(0)
    k_feat, k_src, k_dst, k_w, k_param = jax.random.split(key, 5)

    num_nodes = 16
    in_channels = 4      # dataset.num_node_features
    hidden = 32          # hidden_channels
    num_classes = 8      # dataset.num_classes
    num_edges = 64

    x0 = jax.random.normal(k_feat, (num_nodes, in_channels), jnp.float32)
    edge_index = jnp.stack([
        jax.random.randint(k_src, (num_edges,), 0, num_nodes),
        jax.random.randint(k_dst, (num_edges,), 0, num_nodes),
    ])                                                            # (2, E)
    edge_weight = jax.random.uniform(k_w, (num_edges,), jnp.float32, 0.1, 1.0)

    a = edges_to_dense_adj(edge_index, edge_weight, num_nodes)
    params = make_params(k_param, in_channels, hidden, num_classes)

    out = graphsaint_net_forward(a, x0, params)
    out = jax.block_until_ready(out)

    assert out.shape == (num_nodes, num_classes)
    # log_softmax rows should exp-sum to ~1 (softmax math is f32 in-kernel)
    assert bool(jnp.all(jnp.abs(jnp.sum(jnp.exp(out), axis=-1) - 1.0) < 1e-3))
    # loose check vs. f32 reference (bf16 MXU inputs, f32 accumulation)
    ref = _reference_forward(a, x0, params)
    assert bool(jnp.max(jnp.abs(out - ref)) < 0.3)
    print("KERNEL_OK")
</pallas_src>

<mosaic_0001>
module attributes {stable_mosaic.version = 11 : i64} {
  func.func @_graph_conv_kernel(%arg0: i32, %arg1: i32, %arg2: memref<128x128xbf16, #tpu.memory_space<vmem>>, %arg3: memref<128x8xbf16, #tpu.memory_space<vmem>>, %arg4: memref<128x8xbf16, #tpu.memory_space<vmem>>, %arg5: memref<8x32xbf16, #tpu.memory_space<vmem>>, %arg6: memref<8x32xbf16, #tpu.memory_space<vmem>>, %arg7: memref<1x32xf32, #tpu.memory_space<vmem>>, %arg8: memref<128x32xbf16, #tpu.memory_space<vmem>>, %arg9: memref<128x8xf32, #tpu.memory_space<vmem>>) attributes {dimension_semantics = [#tpu.dimension_semantics<parallel>, #tpu.dimension_semantics<arbitrary>], iteration_bounds = array<i64: 1, 1>, scalar_prefetch = 0 : i64, scratch_operands = 1 : i64, tpu.core_type = #tpu.core_type<tc>, window_params = [{transform_indices = @transform_0, window_bounds = array<i64: 128, 128>}, {transform_indices = @transform_1, window_bounds = array<i64: 128, 8>}, {transform_indices = @transform_2, window_bounds = array<i64: 128, 8>}, {pipeline_mode = #tpu.pipeline_mode<synchronous>, transform_indices = @transform_3, window_bounds = array<i64: 8, 32>}, {pipeline_mode = #tpu.pipeline_mode<synchronous>, transform_indices = @transform_4, window_bounds = array<i64: 8, 32>}, {pipeline_mode = #tpu.pipeline_mode<synchronous>, transform_indices = @transform_5, window_bounds = array<i64: 1, 32>}, {transform_indices = @transform_6, window_bounds = array<i64: 128, 32>}]} {
    %c0_i32 = arith.constant 0 : i32
    %0 = arith.cmpi eq, %arg1, %c0_i32 : i32
    %1 = arith.extui %0 : i1 to i32
    %c0_i32_0 = arith.constant 0 : i32
    %2 = arith.cmpi ne, %1, %c0_i32_0 : i32
    scf.if %2 {
      %cst_10 = arith.constant 0.000000e+00 : f32
      %12 = vector.broadcast %cst_10 : f32 to vector<128x8xf32>
      %c0_11 = arith.constant 0 : index
      %c0_12 = arith.constant 0 : index
      %13 = vector.load %arg9[%c0_11, %c0_12] : memref<128x8xf32, #tpu.memory_space<vmem>>, vector<128x8xf32>
      tpu.vector_store %arg9[%c0_11, %c0_12], %12 {strides = array<i32>} : memref<128x8xf32, #tpu.memory_space<vmem>>, vector<128x8xf32>,
    } else {
    }
    %c0 = arith.constant 0 : index
    %c0_1 = arith.constant 0 : index
    %3 = vector.load %arg9[%c0, %c0_1] : memref<128x8xf32, #tpu.memory_space<vmem>>, vector<128x8xf32>
    %c0_2 = arith.constant 0 : index
    %c0_3 = arith.constant 0 : index
    %4 = vector.load %arg2[%c0_2, %c0_3] : memref<128x128xbf16, #tpu.memory_space<vmem>>, vector<128x128xbf16>
    %c0_4 = arith.constant 0 : index
    %c0_5 = arith.constant 0 : index
    %5 = vector.load %arg3[%c0_4, %c0_5] : memref<128x8xbf16, #tpu.memory_space<vmem>>, vector<128x8xbf16>
    %cst = arith.constant dense<0.000000e+00> : vector<128x8xf32>
    %6 = tpu.matmul %4, %5, %cst {dimension_numbers = #tpu.dot_dimension_numbers<[1], [0], [0], [1], [0, 0, 1, 1], [], []>} : vector<128x128xbf16>, vector<128x8xbf16>, vector<128x8xf32> -> vector<128x8xf32>
    %7 = arith.addf %3, %6 : vector<128x8xf32>
    %c0_6 = arith.constant 0 : index
    %c0_7 = arith.constant 0 : index
    %8 = vector.load %arg9[%c0_6, %c0_7] : memref<128x8xf32, #tpu.memory_space<vmem>>, vector<128x8xf32>
    tpu.vector_store %arg9[%c0_6, %c0_7], %7 {strides = array<i32>} : memref<128x8xf32, #tpu.memory_space<vmem>>, vector<128x8xf32>,
    %c0_i32_8 = arith.constant 0 : i32
    %9 = arith.cmpi eq, %arg1, %c0_i32_8 : i32
    %10 = arith.extui %9 : i1 to i32
    %c0_i32_9 = arith.constant 0 : i32
    %11 = arith.cmpi ne, %10, %c0_i32_9 : i32
    scf.if %11 {
      %c0_10 = arith.constant 0 : index
      %c0_11 = arith.constant 0 : index
      %12 = vector.load %arg9[%c0_10, %c0_11] : memref<128x8xf32, #tpu.memory_space<vmem>>, vector<128x8xf32>
      %13 = arith.truncf %12 : vector<128x8xf32> to vector<128x8xbf16>
      %c0_12 = arith.constant 0 : index
      %c0_13 = arith.constant 0 : index
      %14 = vector.load %arg5[%c0_12, %c0_13] : memref<8x32xbf16, #tpu.memory_space<vmem>>, vector<8x32xbf16>
      %cst_14 = arith.constant dense<0.000000e+00> : vector<128x32xf32>
      %15 = tpu.matmul %13, %14, %cst_14 {dimension_numbers = #tpu.dot_dimension_numbers<[1], [0], [0], [1], [0, 0, 1, 1], [], []>} : vector<128x8xbf16>, vector<8x32xbf16>, vector<128x32xf32> -> vector<128x32xf32>
      %c0_15 = arith.constant 0 : index
      %c0_16 = arith.constant 0 : index
      %16 = vector.load %arg4[%c0_15, %c0_16] : memref<128x8xbf16, #tpu.memory_space<vmem>>, vector<128x8xbf16>
      %c0_17 = arith.constant 0 : index
      %c0_18 = arith.constant 0 : index
      %17 = vector.load %arg6[%c0_17, %c0_18] : memref<8x32xbf16, #tpu.memory_space<vmem>>, vector<8x32xbf16>
      %cst_19 = arith.constant dense<0.000000e+00> : vector<128x32xf32>
      %18 = tpu.matmul %16, %17, %cst_19 {dimension_numbers = #tpu.dot_dimension_numbers<[1], [0], [0], [1], [0, 0, 1, 1], [], []>} : vector<128x8xbf16>, vector<8x32xbf16>, vector<128x32xf32> -> vector<128x32xf32>
      %19 = arith.addf %15, %18 : vector<128x32xf32>
      %c0_20 = arith.constant 0 : index
      %c0_21 = arith.constant 0 : index
      %20 = vector.load %arg7[%c0_20, %c0_21] : memref<1x32xf32, #tpu.memory_space<vmem>>, vector<1x32xf32>
      %21 = vector.broadcast %20 : vector<1x32xf32> to vector<128x32xf32>
      %22 = arith.addf %19, %21 : vector<128x32xf32>
      %cst_22 = arith.constant 0.000000e+00 : f32
      %23 = vector.broadcast %cst_22 : f32 to vector<128x32xf32>
      %24 = arith.maximumf %22, %23 : vector<128x32xf32>
      %25 = arith.truncf %24 : vector<128x32xf32> to vector<128x32xbf16>
      %c0_23 = arith.constant 0 : index
      %c0_24 = arith.constant 0 : index
      %26 = vector.load %arg8[%c0_23, %c0_24] : memref<128x32xbf16, #tpu.memory_space<vmem>>, vector<128x32xbf16>
      tpu.vector_store %arg8[%c0_23, %c0_24], %25 {strides = array<i32>} : memref<128x32xbf16, #tpu.memory_space<vmem>>, vector<128x32xbf16>,
    } else {
    }
    return
  }
  func.func @transform_0(%arg0: i32, %arg1: i32) -> (i32, i32) {
    %c0_i32 = arith.constant 0 : i32
    return %arg0, %arg1 : i32, i32
  }
  func.func @transform_1(%arg0: i32, %arg1: i32) -> (i32, i32) {
    %c0_i32 = arith.constant 0 : i32
    %c0_i32_0 = arith.constant 0 : i32
    return %arg1, %c0_i32 : i32, i32
  }
  func.func @transform_2(%arg0: i32, %arg1: i32) -> (i32, i32) {
    %c0_i32 = arith.constant 0 : i32
    %c0_i32_0 = arith.constant 0 : i32
    return %arg0, %c0_i32 : i32, i32
  }
  func.func @transform_3(%arg0: i32, %arg1: i32) -> (i32, i32) {
    %c0_i32 = arith.constant 0 : i32
    %c0_i32_0 = arith.constant 0 : i32
    %c0_i32_1 = arith.constant 0 : i32
    return %c0_i32, %c0_i32_0 : i32, i32
  }
  func.func @transform_4(%arg0: i32, %arg1: i32) -> (i32, i32) {
    %c0_i32 = arith.constant 0 : i32
    %c0_i32_0 = arith.constant 0 : i32
    %c0_i32_1 = arith.constant 0 : i32
    return %c0_i32, %c0_i32_0 : i32, i32
  }
  func.func @transform_5(%arg0: i32, %arg1: i32) -> (i32, i32) {
    %c0_i32 = arith.constant 0 : i32
    %c0_i32_0 = arith.constant 0 : i32
    %c0_i32_1 = arith.constant 0 : i32
    return %c0_i32, %c0_i32_0 : i32, i32
  }
  func.func @transform_6(%arg0: i32, %arg1: i32) -> (i32, i32) {
    %c0_i32 = arith.constant 0 : i32
    %c0_i32_0 = arith.constant 0 : i32
    return %arg0, %c0_i32 : i32, i32
  }
}

</mosaic_0001>

<llo_original>
// kernel: tpu_custom_call.1
$region0: #{tpu_custom_call.1}
  #allocation0 [shape = 'u32[]', space=smem, size = 0x4, offset = 0x4, fixed_abs, tag = 'smem constant byte address 0x4 - core index']
  #allocation1 [shape = 'u32[144,128]{1,0:T(1,128)}', space=vmem, size = 0x12000, scoped, tag = 'internal scratch']
  #allocation2 [shape = 'f32[128,8]{1,0:T(8,128)}', space=vmem, size = 0x10000, scoped, tag = 'scratch operand']
  %s0 = inlined_call_operand.vmem [shape: bf16[128,128], index: 0, kind: input, shape index: {}]
  %s1 = inlined_call_operand.vmem [shape: bf16[128,8], index: 1, kind: input, shape index: {}]
  %s2 = inlined_call_operand.vmem [shape: bf16[128,8], index: 2, kind: input, shape index: {}]
  %s3 = inlined_call_operand.vmem [shape: bf16[8,32], index: 3, kind: input, shape index: {}]
  %s4 = inlined_call_operand.vmem [shape: bf16[8,32], index: 4, kind: input, shape index: {}]
  %s5 = inlined_call_operand.vmem [shape: f32[1,32], index: 5, kind: input, shape index: {}]
  %s6 = inlined_call_operand.vmem [shape: bf16[128,32], index: 6, kind: output, shape index: {}]
  %s7 = sld [smem:[#allocation0]]
  $region42: #{tpu_custom_call.1} parent=0
    _
  %s9 = ssub.s32 1, %s7
  %s10 = scalar_select 0, %s9, %s7
  // Predicated region
  $region2: #{tpu_custom_call.1} parent=0 // pred_check
    _
  $region3: #{tpu_custom_call.1} parent=0 // pred_check_branch
    %12 = sbr.rel (0) target = $region5
  $region4: #{tpu_custom_call.1} parent=0 // pred_region
    _
  $region5: #{tpu_custom_call.1} parent=0 // pred_fallthru
    _
  // Predicated region
  $region6: #{tpu_custom_call.1} parent=0 // pred_check
    _
  $region7: #{tpu_custom_call.1} parent=0 // pred_check_branch
    %14 = sbr.rel (0) target = $region9
  $region8: #{tpu_custom_call.1} parent=0 // pred_region
    _
  $region9: #{tpu_custom_call.1} parent=0 // pred_fallthru
    _
  // Predicated region
  $region10: #{tpu_custom_call.1} parent=0 // pred_check
    _
  $region11: #{tpu_custom_call.1} parent=0 // pred_check_branch
    %16 = sbr.rel (0) target = $region13
  $region12: #{tpu_custom_call.1} parent=0 // pred_region
    _
  $region13: #{tpu_custom_call.1} parent=0 // pred_fallthru
    _
  // Predicated region
  $region14: #{tpu_custom_call.1} parent=0 // pred_check
    _
  $region15: #{tpu_custom_call.1} parent=0 // pred_check_branch
    %18 = sbr.rel (0) target = $region17
  $region16: #{tpu_custom_call.1} parent=0 // pred_region
    _
  $region17: #{tpu_custom_call.1} parent=0 // pred_fallthru
    _
  // Predicated region
  $region18: #{tpu_custom_call.1} parent=0 // pred_check
    _
  $region19: #{tpu_custom_call.1} parent=0 // pred_check_branch
    %20 = sbr.rel (0) target = $region21
  $region20: #{tpu_custom_call.1} parent=0 // pred_region
    _
  $region21: #{tpu_custom_call.1} parent=0 // pred_fallthru
    _
  // Predicated region
  $region22: #{tpu_custom_call.1} parent=0 // pred_check
    _
  $region23: #{tpu_custom_call.1} parent=0 // pred_check_branch
    %22 = sbr.rel (0) target = $region25
  $region24: #{tpu_custom_call.1} parent=0 // pred_region
    _
  $region25: #{tpu_custom_call.1} parent=0 // pred_fallthru
    _
  %p24 = scmp.eq.s32.totalorder 0, 0
  // Predicated region
  $region26: #{tpu_custom_call.1} parent=0 // pred_check
    %p25 = pneg %p24
  $region27: #{tpu_custom_call.1} parent=0 // pred_check_branch
    %27 = sbr.rel (%p25) target = $region29
  $region28: #{tpu_custom_call.1} parent=0 // pred_region
    %vm28 = vcmask 64512
    %29 = vst.msk [vmem:[#allocation2] sm:$0xff] %vm28, 0.0
    %30 = vst.msk [vmem:[#allocation2 + $0x8] sm:$0xff] %vm28, 0.0
    %31 = vst.msk [vmem:[#allocation2 + $0x10] sm:$0xff] %vm28, 0.0
    %32 = vst.msk [vmem:[#allocation2 + $0x18] sm:$0xff] %vm28, 0.0
    %33 = vst.msk [vmem:[#allocation2 + $0x20] sm:$0xff] %vm28, 0.0
    %34 = vst.msk [vmem:[#allocation2 + $0x28] sm:$0xff] %vm28, 0.0
    %35 = vst.msk [vmem:[#allocation2 + $0x30] sm:$0xff] %vm28, 0.0
    %36 = vst.msk [vmem:[#allocation2 + $0x38] sm:$0xff] %vm28, 0.0
    %37 = vst.msk [vmem:[#allocation2 + $0x40] sm:$0xff] %vm28, 0.0
    %38 = vst.msk [vmem:[#allocation2 + $0x48] sm:$0xff] %vm28, 0.0
    %39 = vst.msk [vmem:[#allocation2 + $0x50] sm:$0xff] %vm28, 0.0
    %40 = vst.msk [vmem:[#allocation2 + $0x58] sm:$0xff] %vm28, 0.0
    %41 = vst.msk [vmem:[#allocation2 + $0x60] sm:$0xff] %vm28, 0.0
    %42 = vst.msk [vmem:[#allocation2 + $0x68] sm:$0xff] %vm28, 0.0
    %43 = vst.msk [vmem:[#allocation2 + $0x70] sm:$0xff] %vm28, 0.0
    %44 = vst.msk [vmem:[#allocation2 + $0x78] sm:$0xff] %vm28, 0.0
  $region29: #{tpu_custom_call.1} parent=0 // pred_fallthru
    _
  %v45 = vld [vmem:[#allocation2] sm:$0xff]
  %v46 = vld [vmem:[#allocation2 + $0x8] sm:$0xff]
  %v47 = vld [vmem:[#allocation2 + $0x10] sm:$0xff]
  %v48 = vld [vmem:[#allocation2 + $0x18] sm:$0xff]
  %v49 = vld [vmem:[#allocation2 + $0x20] sm:$0xff]
  %v50 = vld [vmem:[#allocation2 + $0x28] sm:$0xff]
  %v51 = vld [vmem:[#allocation2 + $0x30] sm:$0xff]
  %v52 = vld [vmem:[#allocation2 + $0x38] sm:$0xff]
  %v53 = vld [vmem:[#allocation2 + $0x40] sm:$0xff]
  %v54 = vld [vmem:[#allocation2 + $0x48] sm:$0xff]
  %v55 = vld [vmem:[#allocation2 + $0x50] sm:$0xff]
  %v56 = vld [vmem:[#allocation2 + $0x58] sm:$0xff]
  %v57 = vld [vmem:[#allocation2 + $0x60] sm:$0xff]
  %v58 = vld [vmem:[#allocation2 + $0x68] sm:$0xff]
  %v59 = vld [vmem:[#allocation2 + $0x70] sm:$0xff]
  %v60 = vld [vmem:[#allocation2 + $0x78] sm:$0xff]
  %v61 = vld [vmem:[%s0] sm:$0xf]
  %v62 = vld [vmem:[%s0 + $0x4] sm:$0xf]
  %v63 = vld [vmem:[%s0 + $0x8] sm:$0xf]
  %v64 = vld [vmem:[%s0 + $0xc] sm:$0xf]
  %v65 = vld [vmem:[%s0 + $0x10] sm:$0xf]
  %v66 = vld [vmem:[%s0 + $0x14] sm:$0xf]
  %v67 = vld [vmem:[%s0 + $0x18] sm:$0xf]
  %v68 = vld [vmem:[%s0 + $0x1c] sm:$0xf]
  %v69 = vld [vmem:[%s0 + $0x20] sm:$0xf]
  %v70 = vld [vmem:[%s0 + $0x24] sm:$0xf]
  %v71 = vld [vmem:[%s0 + $0x28] sm:$0xf]
  %v72 = vld [vmem:[%s0 + $0x2c] sm:$0xf]
  %v73 = vld [vmem:[%s0 + $0x30] sm:$0xf]
  %v74 = vld [vmem:[%s0 + $0x34] sm:$0xf]
  %v75 = vld [vmem:[%s0 + $0x38] sm:$0xf]
  %v76 = vld [vmem:[%s0 + $0x3c] sm:$0xf]
  %v77 = vld [vmem:[%s1] sm:$0xf]
  %v78 = vld [vmem:[%s1 + $0x4] sm:$0xf]
  %v79 = vld [vmem:[%s1 + $0x8] sm:$0xf]
  %v80 = vld [vmem:[%s1 + $0xc] sm:$0xf]
  %v81 = vld [vmem:[%s1 + $0x10] sm:$0xf]
  %v82 = vld [vmem:[%s1 + $0x14] sm:$0xf]
  %v83 = vld [vmem:[%s1 + $0x18] sm:$0xf]
  %v84 = vld [vmem:[%s1 + $0x1c] sm:$0xf]
  %v85 = vld [vmem:[%s1 + $0x20] sm:$0xf]
  %v86 = vld [vmem:[%s1 + $0x24] sm:$0xf]
  %v87 = vld [vmem:[%s1 + $0x28] sm:$0xf]
  %v88 = vld [vmem:[%s1 + $0x2c] sm:$0xf]
  %v89 = vld [vmem:[%s1 + $0x30] sm:$0xf]
  %v90 = vld [vmem:[%s1 + $0x34] sm:$0xf]
  %v91 = vld [vmem:[%s1 + $0x38] sm:$0xf]
  %v92 = vld [vmem:[%s1 + $0x3c] sm:$0xf]
  %v109 = vunpack.c.l.b16 %v61
  %v110 = vunpack.c.l.b16 %v62
  %v111 = vunpack.c.l.b16 %v63
  %v112 = vunpack.c.l.b16 %v64
  %v113 = vunpack.c.l.b16 %v65
  %v114 = vunpack.c.l.b16 %v66
  %v115 = vunpack.c.l.b16 %v67
  %v116 = vunpack.c.l.b16 %v68
  %v117 = vunpack.c.l.b16 %v69
  %v118 = vunpack.c.l.b16 %v70
  %v119 = vunpack.c.l.b16 %v71
  %v120 = vunpack.c.l.b16 %v72
  %v121 = vunpack.c.l.b16 %v73
  %v122 = vunpack.c.l.b16 %v74
  %v123 = vunpack.c.l.b16 %v75
  %v124 = vunpack.c.l.b16 %v76
  %v125 = vpack.c.b16 %v110, %v109
  %v126 = vpack.c.b16 %v112, %v111
  %v127 = vpack.c.b16 %v114, %v113
  %v128 = vpack.c.b16 %v116, %v115
  %v129 = vpack.c.b16 %v118, %v117
  %v130 = vpack.c.b16 %v120, %v119
  %v131 = vpack.c.b16 %v122, %v121
  %v132 = vpack.c.b16 %v124, %v123
  %v157 = vunpack.c.l.b16 %v77
  %v158 = vunpack.c.l.b16 %v78
  %v159 = vunpack.c.l.b16 %v79
  %v160 = vunpack.c.l.b16 %v80
  %v161 = vunpack.c.l.b16 %v81
  %v162 = vunpack.c.l.b16 %v82
  %v163 = vunpack.c.l.b16 %v83
  %v164 = vunpack.c.l.b16 %v84
  %v165 = vunpack.c.l.b16 %v85
  %v166 = vunpack.c.l.b16 %v86
  %v167 = vunpack.c.l.b16 %v87
  %v168 = vunpack.c.l.b16 %v88
  %v169 = vunpack.c.l.b16 %v89
  %v170 = vunpack.c.l.b16 %v90
  %v171 = vunpack.c.l.b16 %v91
  %v172 = vunpack.c.l.b16 %v92
  %v173 = vpack.c.b16 %v158, %v157
  %v174 = vpack.c.b16 %v160, %v159
  %v175 = vpack.c.b16 %v162, %v161
  %v176 = vpack.c.b16 %v164, %v163
  %v177 = vpack.c.b16 %v166, %v165
  %v178 = vpack.c.b16 %v168, %v167
  %v179 = vpack.c.b16 %v170, %v169
  %v180 = vpack.c.b16 %v172, %v171
  %189 = vmatprep.subr.bf16.mxu0 0
  %190 = vmatpush1.bf16.msra.mxu0 %v173
  %191 = vmatprep.subr.bf16.mxu0 0
  %192 = vmatpush1.bf16.msra.mxu0 %v174
  %193 = vmatprep.subr.bf16.mxu0 0
  %194 = vmatpush1.bf16.msra.mxu0 %v175
  %195 = vmatprep.subr.bf16.mxu0 0
  %196 = vmatpush1.bf16.msra.mxu0 %v176
  %197 = vmatprep.subr.bf16.mxu0 0
  %198 = vmatpush1.bf16.msra.mxu0 %v177
  %199 = vmatprep.subr.bf16.mxu0 0
  %200 = vmatpush1.bf16.msra.mxu0 %v178
  %201 = vmatprep.subr.bf16.mxu0 0
  %202 = vmatpush1.bf16.msra.mxu0 %v179
  %203 = vmatprep.subr.bf16.mxu0 0
  %204 = vmatpush1.bf16.msra.mxu0 %v180
  %205 = vmatprep.subr.bf16.mxu0 0
  %206 = vmatpush1.bf16.msra.mxu0 0
  %207 = vmatprep.subr.bf16.mxu0 0
  %208 = vmatpush1.bf16.msra.mxu0 0
  %209 = vmatprep.subr.bf16.mxu0 0
  %210 = vmatpush1.bf16.msra.mxu0 0
  %211 = vmatprep.subr.bf16.mxu0 0
  %212 = vmatpush1.bf16.msra.mxu0 0
  %213 = vmatprep.subr.bf16.mxu0 0
  %214 = vmatpush1.bf16.msra.mxu0 0
  %215 = vmatprep.subr.bf16.mxu0 0
  %216 = vmatpush1.bf16.msra.mxu0 0
  %217 = vmatprep.subr.bf16.mxu0 0
  %218 = vmatpush1.bf16.msra.mxu0 0
  %219 = vmatprep.subr.bf16.mxu0 0
  %220 = vmatpush1.bf16.msra.mxu0 0
  %221 = vmatprep.mubr.bf16.mxu0 0
  %222 = vmatmul.mubr.bf16.gmra.mrb[0].mxu0 %v125
  %v223 = vpop.f32.mrb[0].mxu0
  %v224 = vadd.f32 0.0, %v223
  %v225 = vpop.f32.mrb[0].mxu0
  %v226 = vpop.f32.mrb[0].mxu0
  %v227 = vadd.f32 0.0, %v226
  %v228 = vpop.f32.mrb[0].mxu0
  %229 = vmatprep.mubr.bf16.mxu0 0
  %230 = vmatmul.mubr.bf16.gmra.mrb[0].mxu0 %v126
  %v231 = vpop.f32.mrb[0].mxu0
  %v232 = vadd.f32 0.0, %v231
  %v233 = vpop.f32.mrb[0].mxu0
  %v234 = vpop.f32.mrb[0].mxu0
  %v235 = vadd.f32 0.0, %v234
  %v236 = vpop.f32.mrb[0].mxu0
  %237 = vmatprep.mubr.bf16.mxu0 0
  %238 = vmatmul.mubr.bf16.gmra.mrb[0].mxu0 %v127
  %v239 = vpop.f32.mrb[0].mxu0
  %v240 = vadd.f32 0.0, %v239
  %v241 = vpop.f32.mrb[0].mxu0
  %v242 = vpop.f32.mrb[0].mxu0
  %v243 = vadd.f32 0.0, %v242
  %v244 = vpop.f32.mrb[0].mxu0
  %245 = vmatprep.mubr.bf16.mxu0 0
  %246 = vmatmul.mubr.bf16.gmra.mrb[0].mxu0 %v128
  %v247 = vpop.f32.mrb[0].mxu0
  %v248 = vadd.f32 0.0, %v247
  %v249 = vpop.f32.mrb[0].mxu0
  %v250 = vpop.f32.mrb[0].mxu0
  %v251 = vadd.f32 0.0, %v250
  %v252 = vpop.f32.mrb[0].mxu0
  %253 = vmatprep.mubr.bf16.mxu0 0
  %254 = vmatmul.mubr.bf16.gmra.mrb[0].mxu0 %v129
  %v255 = vpop.f32.mrb[0].mxu0
  %v256 = vadd.f32 0.0, %v255
  %v257 = vpop.f32.mrb[0].mxu0
  %v258 = vpop.f32.mrb[0].mxu0
  %v259 = vadd.f32 0.0, %v258
  %v260 = vpop.f32.mrb[0].mxu0
  %261 = vmatprep.mubr.bf16.mxu0 0
  %262 = vmatmul.mubr.bf16.gmra.mrb[0].mxu0 %v130
  %v263 = vpop.f32.mrb[0].mxu0
  %v264 = vadd.f32 0.0, %v263
  %v265 = vpop.f32.mrb[0].mxu0
  %v266 = vpop.f32.mrb[0].mxu0
  %v267 = vadd.f32 0.0, %v266
  %v268 = vpop.f32.mrb[0].mxu0
  %269 = vmatprep.mubr.bf16.mxu0 0
  %270 = vmatmul.mubr.bf16.gmra.mrb[0].mxu0 %v131
  %v271 = vpop.f32.mrb[0].mxu0
  %v272 = vadd.f32 0.0, %v271
  %v273 = vpop.f32.mrb[0].mxu0
  %v274 = vpop.f32.mrb[0].mxu0
  %v275 = vadd.f32 0.0, %v274
  %v276 = vpop.f32.mrb[0].mxu0
  %277 = vmatprep.mubr.bf16.mxu0 0
  %278 = vmatmul.mubr.bf16.gmra.mrb[0].mxu0 %v132
  %v279 = vpop.f32.mrb[0].mxu0
  %v280 = vadd.f32 0.0, %v279
  %v281 = vpop.f32.mrb[0].mxu0
  %v282 = vpop.f32.mrb[0].mxu0
  %v283 = vadd.f32 0.0, %v282
  %v284 = vpop.f32.mrb[0].mxu0
  %285 = vdwg.mxu0
  %v286 = vadd.f32 %v45, %v224
  %v287 = vadd.f32 %v46, %v227
  %v288 = vadd.f32 %v47, %v232
  %v289 = vadd.f32 %v48, %v235
  %v290 = vadd.f32 %v49, %v240
  %v291 = vadd.f32 %v50, %v243
  %v292 = vadd.f32 %v51, %v248
  %v293 = vadd.f32 %v52, %v251
  %v294 = vadd.f32 %v53, %v256
  %v295 = vadd.f32 %v54, %v259
  %v296 = vadd.f32 %v55, %v264
  %v297 = vadd.f32 %v56, %v267
  %v298 = vadd.f32 %v57, %v272
  %v299 = vadd.f32 %v58, %v275
  %v300 = vadd.f32 %v59, %v280
  %v301 = vadd.f32 %v60, %v283
  %vm302 = vcmask 64512
  %303 = vst.msk [vmem:[#allocation2] sm:$0xff] %vm302, %v286
  %304 = vst.msk [vmem:[#allocation2 + $0x8] sm:$0xff] %vm302, %v287
  %305 = vst.msk [vmem:[#allocation2 + $0x10] sm:$0xff] %vm302, %v288
  %306 = vst.msk [vmem:[#allocation2 + $0x18] sm:$0xff] %vm302, %v289
  %307 = vst.msk [vmem:[#allocation2 + $0x20] sm:$0xff] %vm302, %v290
  %308 = vst.msk [vmem:[#allocation2 + $0x28] sm:$0xff] %vm302, %v291
  %309 = vst.msk [vmem:[#allocation2 + $0x30] sm:$0xff] %vm302, %v292
  %310 = vst.msk [vmem:[#allocation2 + $0x38] sm:$0xff] %vm302, %v293
  %311 = vst.msk [vmem:[#allocation2 + $0x40] sm:$0xff] %vm302, %v294
  %312 = vst.msk [vmem:[#allocation2 + $0x48] sm:$0xff] %vm302, %v295
  %313 = vst.msk [vmem:[#allocation2 + $0x50] sm:$0xff] %vm302, %v296
  %314 = vst.msk [vmem:[#allocation2 + $0x58] sm:$0xff] %vm302, %v297
  %315 = vst.msk [vmem:[#allocation2 + $0x60] sm:$0xff] %vm302, %v298
  %316 = vst.msk [vmem:[#allocation2 + $0x68] sm:$0xff] %vm302, %v299
  %317 = vst.msk [vmem:[#allocation2 + $0x70] sm:$0xff] %vm302, %v300
  %318 = vst.msk [vmem:[#allocation2 + $0x78] sm:$0xff] %vm302, %v301
  // Predicated region
  $region30: #{tpu_custom_call.1} parent=0 // pred_check
    %p319 = pneg %p24
  $region31: #{tpu_custom_call.1} parent=0 // pred_check_branch
    %321 = sbr.rel (%p319) target = $region33
  $region32: #{tpu_custom_call.1} parent=0 // pred_region
    %v322 = vld [vmem:[#allocation2] sm:$0xff]
    %v323 = vld [vmem:[#allocation2 + $0x8] sm:$0xff]
    %v324 = vld [vmem:[#allocation2 + $0x10] sm:$0xff]
    %v325 = vld [vmem:[#allocation2 + $0x18] sm:$0xff]
    %v326 = vld [vmem:[#allocation2 + $0x20] sm:$0xff]
    %v327 = vld [vmem:[#allocation2 + $0x28] sm:$0xff]
    %v328 = vld [vmem:[#allocation2 + $0x30] sm:$0xff]
    %v329 = vld [vmem:[#allocation2 + $0x38] sm:$0xff]
    %v330 = vld [vmem:[#allocation2 + $0x40] sm:$0xff]
    %v331 = vld [vmem:[#allocation2 + $0x48] sm:$0xff]
    %v332 = vld [vmem:[#allocation2 + $0x50] sm:$0xff]
    %v333 = vld [vmem:[#allocation2 + $0x58] sm:$0xff]
    %v334 = vld [vmem:[#allocation2 + $0x60] sm:$0xff]
    %v335 = vld [vmem:[#allocation2 + $0x68] sm:$0xff]
    %v336 = vld [vmem:[#allocation2 + $0x70] sm:$0xff]
    %v337 = vld [vmem:[#allocation2 + $0x78] sm:$0xff]
    %v338 = vpack.c.bf16 %v323, %v322
    %v339 = vpack.c.bf16 %v325, %v324
    %v340 = vpack.c.bf16 %v327, %v326
    %v341 = vpack.c.bf16 %v329, %v328
    %v342 = vpack.c.bf16 %v331, %v330
    %v343 = vpack.c.bf16 %v333, %v332
    %v344 = vpack.c.bf16 %v335, %v334
    %v345 = vpack.c.bf16 %v337, %v336
    %v346 = vld [vmem:[%s3] sm:$0xf]
    %v347 = vld [vmem:[%s2] sm:$0xf]
    %v348 = vld [vmem:[%s2 + $0x4] sm:$0xf]
    %v349 = vld [vmem:[%s2 + $0x8] sm:$0xf]
    %v350 = vld [vmem:[%s2 + $0xc] sm:$0xf]
    %v351 = vld [vmem:[%s2 + $0x10] sm:$0xf]
    %v352 = vld [vmem:[%s2 + $0x14] sm:$0xf]
    %v353 = vld [vmem:[%s2 + $0x18] sm:$0xf]
    %v354 = vld [vmem:[%s2 + $0x1c] sm:$0xf]
    %v355 = vld [vmem:[%s2 + $0x20] sm:$0xf]
    %v356 = vld [vmem:[%s2 + $0x24] sm:$0xf]
    %v357 = vld [vmem:[%s2 + $0x28] sm:$0xf]
    %v358 = vld [vmem:[%s2 + $0x2c] sm:$0xf]
    %v359 = vld [vmem:[%s2 + $0x30] sm:$0xf]
    %v360 = vld [vmem:[%s2 + $0x34] sm:$0xf]
    %v361 = vld [vmem:[%s2 + $0x38] sm:$0xf]
    %v362 = vld [vmem:[%s2 + $0x3c] sm:$0xf]
    %v363 = vld [vmem:[%s4] sm:$0xf]
    %v380 = vunpack.c.l.b16 %v347
    %v381 = vunpack.c.l.b16 %v348
    %v382 = vunpack.c.l.b16 %v349
    %v383 = vunpack.c.l.b16 %v350
    %v384 = vunpack.c.l.b16 %v351
    %v385 = vunpack.c.l.b16 %v352
    %v386 = vunpack.c.l.b16 %v353
    %v387 = vunpack.c.l.b16 %v354
    %v388 = vunpack.c.l.b16 %v355
    %v389 = vunpack.c.l.b16 %v356
    %v390 = vunpack.c.l.b16 %v357
    %v391 = vunpack.c.l.b16 %v358
    %v392 = vunpack.c.l.b16 %v359
    %v393 = vunpack.c.l.b16 %v360
    %v394 = vunpack.c.l.b16 %v361
    %v395 = vunpack.c.l.b16 %v362
    %v396 = vpack.c.b16 %v381, %v380
    %v397 = vpack.c.b16 %v383, %v382
    %v398 = vpack.c.b16 %v385, %v384
    %v399 = vpack.c.b16 %v387, %v386
    %v400 = vpack.c.b16 %v389, %v388
    %v401 = vpack.c.b16 %v391, %v390
    %v402 = vpack.c.b16 %v393, %v392
    %v403 = vpack.c.b16 %v395, %v394
    %v405 = vsel %vm302, %v396, 0
    %v408 = vsel %vm302, %v397, 0
    %v411 = vsel %vm302, %v398, 0
    %v414 = vsel %vm302, %v399, 0
    %v417 = vsel %vm302, %v400, 0
    %v420 = vsel %vm302, %v401, 0
    %v423 = vsel %vm302, %v402, 0
    %v426 = vsel %vm302, %v403, 0
    %vm428 = vcmask 1043456
    %v430 = vsel %vm428, %v363, 0
    %432 = vmatprep.subr.bf16.mxu0 0
    %433 = vmatpush1.bf16.msra.mxu0 %v430
    %434 = vmatprep.subr.bf16.mxu0 0
    %435 = vmatpush1.bf16.msra.mxu0 0
    %436 = vmatprep.subr.bf16.mxu0 0
    %437 = vmatpush1.bf16.msra.mxu0 0
    %438 = vmatprep.subr.bf16.mxu0 0
    %439 = vmatpush1.bf16.msra.mxu0 0
    %440 = vmatprep.subr.bf16.mxu0 0
    %441 = vmatpush1.bf16.msra.mxu0 0
    %442 = vmatprep.subr.bf16.mxu0 0
    %443 = vmatpush1.bf16.msra.mxu0 0
    %444 = vmatprep.subr.bf16.mxu0 0
    %445 = vmatpush1.bf16.msra.mxu0 0
    %446 = vmatprep.subr.bf16.mxu0 0
    %447 = vmatpush1.bf16.msra.mxu0 0
    %448 = vmatprep.subr.bf16.mxu0 0
    %449 = vmatpush1.bf16.msra.mxu0 0
    %450 = vmatprep.subr.bf16.mxu0 0
    %451 = vmatpush1.bf16.msra.mxu0 0
    %452 = vmatprep.subr.bf16.mxu0 0
    %453 = vmatpush1.bf16.msra.mxu0 0
    %454 = vmatprep.subr.bf16.mxu0 0
    %455 = vmatpush1.bf16.msra.mxu0 0
    %456 = vmatprep.subr.bf16.mxu0 0
    %457 = vmatpush1.bf16.msra.mxu0 0
    %458 = vmatprep.subr.bf16.mxu0 0
    %459 = vmatpush1.bf16.msra.mxu0 0
    %460 = vmatprep.subr.bf16.mxu0 0
    %461 = vmatpush1.bf16.msra.mxu0 0
    %462 = vmatprep.subr.bf16.mxu0 0
    %463 = vmatpush1.bf16.msra.mxu0 0
    %464 = vmatprep.mubr.bf16.mxu0 0
    %465 = vmatmul.mubr.bf16.gmra.mrb[0].mxu0 %v405
    %v466 = vpop.f32.mrb[0].mxu0
    %v467 = vadd.f32 0.0, %v466
    %v468 = vpop.f32.mrb[0].mxu0
    %v469 = vpop.f32.mrb[0].mxu0
    %v470 = vadd.f32 0.0, %v469
    %v471 = vpop.f32.mrb[0].mxu0
    %472 = vmatprep.mubr.bf16.mxu0 0
    %473 = vmatmul.mubr.bf16.gmra.mrb[0].mxu0 %v408
    %v474 = vpop.f32.mrb[0].mxu0
    %v475 = vadd.f32 0.0, %v474
    %v476 = vpop.f32.mrb[0].mxu0
    %v477 = vpop.f32.mrb[0].mxu0
    %v478 = vadd.f32 0.0, %v477
    %v479 = vpop.f32.mrb[0].mxu0
    %480 = vmatprep.mubr.bf16.mxu0 0
    %481 = vmatmul.mubr.bf16.gmra.mrb[0].mxu0 %v411
    %v482 = vpop.f32.mrb[0].mxu0
    %v483 = vadd.f32 0.0, %v482
    %v484 = vpop.f32.mrb[0].mxu0
    %v485 = vpop.f32.mrb[0].mxu0
    %v486 = vadd.f32 0.0, %v485
    %v487 = vpop.f32.mrb[0].mxu0
    %488 = vmatprep.mubr.bf16.mxu0 0
    %489 = vmatmul.mubr.bf16.gmra.mrb[0].mxu0 %v414
    %v490 = vpop.f32.mrb[0].mxu0
    %v491 = vadd.f32 0.0, %v490
    %v492 = vpop.f32.mrb[0].mxu0
    %v493 = vpop.f32.mrb[0].mxu0
    %v494 = vadd.f32 0.0, %v493
    %v495 = vpop.f32.mrb[0].mxu0
    %496 = vmatprep.mubr.bf16.mxu0 0
    %497 = vmatmul.mubr.bf16.gmra.mrb[0].mxu0 %v417
    %v498 = vpop.f32.mrb[0].mxu0
    %v499 = vadd.f32 0.0, %v498
    %v500 = vpop.f32.mrb[0].mxu0
    %v501 = vpop.f32.mrb[0].mxu0
    %v502 = vadd.f32 0.0, %v501
    %v503 = vpop.f32.mrb[0].mxu0
    %504 = vmatprep.mubr.bf16.mxu0 0
    %505 = vmatmul.mubr.bf16.gmra.mrb[0].mxu0 %v420
    %v506 = vpop.f32.mrb[0].mxu0
    %v507 = vadd.f32 0.0, %v506
    %v508 = vpop.f32.mrb[0].mxu0
    %v509 = vpop.f32.mrb[0].mxu0
    %v510 = vadd.f32 0.0, %v509
    %v511 = vpop.f32.mrb[0].mxu0
    %512 = vmatprep.mubr.bf16.mxu0 0
    %513 = vmatmul.mubr.bf16.gmra.mrb[0].mxu0 %v423
    %v514 = vpop.f32.mrb[0].mxu0
    %v515 = vadd.f32 0.0, %v514
    %v516 = vpop.f32.mrb[0].mxu0
    %v517 = vpop.f32.mrb[0].mxu0
    %v518 = vadd.f32 0.0, %v517
    %v519 = vpop.f32.mrb[0].mxu0
    %520 = vmatprep.mubr.bf16.mxu0 0
    %521 = vmatmul.mubr.bf16.gmra.mrb[0].mxu0 %v426
    %v522 = vpop.f32.mrb[0].mxu0
    %v523 = vadd.f32 0.0, %v522
    %v524 = vpop.f32.mrb[0].mxu0
    %v525 = vpop.f32.mrb[0].mxu0
    %v526 = vadd.f32 0.0, %v525
    %v527 = vpop.f32.mrb[0].mxu0
    %528 = vdwg.mxu0
    %v530 = vsel %vm302, %v338, 0
    %v533 = vsel %vm302, %v339, 0
    %v536 = vsel %vm302, %v340, 0
    %v539 = vsel %vm302, %v341, 0
    %v542 = vsel %vm302, %v342, 0
    %v545 = vsel %vm302, %v343, 0
    %v548 = vsel %vm302, %v344, 0
    %v551 = vsel %vm302, %v345, 0
    %v554 = vsel %vm428, %v346, 0
    %556 = vmatprep.subr.bf16.mxu0 0
    %557 = vmatpush1.bf16.msra.mxu0 %v554
    %558 = vmatprep.subr.bf16.mxu0 0
    %559 = vmatpush1.bf16.msra.mxu0 0
    %560 = vmatprep.subr.bf16.mxu0 0
    %561 = vmatpush1.bf16.msra.mxu0 0
    %562 = vmatprep.subr.bf16.mxu0 0
    %563 = vmatpush1.bf16.msra.mxu0 0
    %564 = vmatprep.subr.bf16.mxu0 0
    %565 = vmatpush1.bf16.msra.mxu0 0
    %566 = vmatprep.subr.bf16.mxu0 0
    %567 = vmatpush1.bf16.msra.mxu0 0
    %568 = vmatprep.subr.bf16.mxu0 0
    %569 = vmatpush1.bf16.msra.mxu0 0
    %570 = vmatprep.subr.bf16.mxu0 0
    %571 = vmatpush1.bf16.msra.mxu0 0
    %572 = vmatprep.subr.bf16.mxu0 0
    %573 = vmatpush1.bf16.msra.mxu0 0
    %574 = vmatprep.subr.bf16.mxu0 0
    %575 = vmatpush1.bf16.msra.mxu0 0
    %576 = vmatprep.subr.bf16.mxu0 0
    %577 = vmatpush1.bf16.msra.mxu0 0
    %578 = vmatprep.subr.bf16.mxu0 0
    %579 = vmatpush1.bf16.msra.mxu0 0
    %580 = vmatprep.subr.bf16.mxu0 0
    %581 = vmatpush1.bf16.msra.mxu0 0
    %582 = vmatprep.subr.bf16.mxu0 0
    %583 = vmatpush1.bf16.msra.mxu0 0
    %584 = vmatprep.subr.bf16.mxu0 0
    %585 = vmatpush1.bf16.msra.mxu0 0
    %586 = vmatprep.subr.bf16.mxu0 0
    %587 = vmatpush1.bf16.msra.mxu0 0
    %588 = vmatprep.mubr.bf16.mxu0 0
    %589 = vmatmul.mubr.bf16.gmra.mrb[0].mxu0 %v530
    %v590 = vpop.f32.mrb[0].mxu0
    %v591 = vadd.f32 %v467, %v590
    %v592 = vpop.f32.mrb[0].mxu0
    %v593 = vpop.f32.mrb[0].mxu0
    %v594 = vadd.f32 %v470, %v593
    %v595 = vpop.f32.mrb[0].mxu0
    %596 = vmatprep.mubr.bf16.mxu0 0
    %597 = vmatmul.mubr.bf16.gmra.mrb[0].mxu0 %v533
    %v598 = vpop.f32.mrb[0].mxu0
    %v599 = vadd.f32 %v475, %v598
    %v600 = vpop.f32.mrb[0].mxu0
    %v601 = vpop.f32.mrb[0].mxu0
    %v602 = vadd.f32 %v478, %v601
    %v603 = vpop.f32.mrb[0].mxu0
    %604 = vmatprep.mubr.bf16.mxu0 0
    %605 = vmatmul.mubr.bf16.gmra.mrb[0].mxu0 %v536
    %v606 = vpop.f32.mrb[0].mxu0
    %v607 = vadd.f32 %v483, %v606
    %v608 = vpop.f32.mrb[0].mxu0
    %v609 = vpop.f32.mrb[0].mxu0
    %v610 = vadd.f32 %v486, %v609
    %v611 = vpop.f32.mrb[0].mxu0
    %612 = vmatprep.mubr.bf16.mxu0 0
    %613 = vmatmul.mubr.bf16.gmra.mrb[0].mxu0 %v539
    %v614 = vpop.f32.mrb[0].mxu0
    %v615 = vadd.f32 %v491, %v614
    %v616 = vpop.f32.mrb[0].mxu0
    %v617 = vpop.f32.mrb[0].mxu0
    %v618 = vadd.f32 %v494, %v617
    %v619 = vpop.f32.mrb[0].mxu0
    %620 = vmatprep.mubr.bf16.mxu0 0
    %621 = vmatmul.mubr.bf16.gmra.mrb[0].mxu0 %v542
    %v622 = vpop.f32.mrb[0].mxu0
    %v623 = vadd.f32 %v499, %v622
    %v624 = vpop.f32.mrb[0].mxu0
    %v625 = vpop.f32.mrb[0].mxu0
    %v626 = vadd.f32 %v502, %v625
    %v627 = vpop.f32.mrb[0].mxu0
    %628 = vmatprep.mubr.bf16.mxu0 0
    %629 = vmatmul.mubr.bf16.gmra.mrb[0].mxu0 %v545
    %v630 = vpop.f32.mrb[0].mxu0
    %v631 = vadd.f32 %v507, %v630
    %v632 = vpop.f32.mrb[0].mxu0
    %v633 = vpop.f32.mrb[0].mxu0
    %v634 = vadd.f32 %v510, %v633
    %v635 = vpop.f32.mrb[0].mxu0
    %636 = vmatprep.mubr.bf16.mxu0 0
    %637 = vmatmul.mubr.bf16.gmra.mrb[0].mxu0 %v548
    %v638 = vpop.f32.mrb[0].mxu0
    %v639 = vadd.f32 %v515, %v638
    %v640 = vpop.f32.mrb[0].mxu0
    %v641 = vpop.f32.mrb[0].mxu0
    %v642 = vadd.f32 %v518, %v641
    %v643 = vpop.f32.mrb[0].mxu0
    %644 = vmatprep.mubr.bf16.mxu0 0
    %645 = vmatmul.mubr.bf16.gmra.mrb[0].mxu0 %v551
    %v646 = vpop.f32.mrb[0].mxu0
    %v647 = vadd.f32 %v523, %v646
    %v648 = vpop.f32.mrb[0].mxu0
    %v649 = vpop.f32.mrb[0].mxu0
    %v650 = vadd.f32 %v526, %v649
    %v651 = vpop.f32.mrb[0].mxu0
    %652 = vdwg.mxu0
    %v653 = vld [vmem:[%s5] sm:$0x1]
    %v655 = vlaneseq
    %v656 = vshrl.u32 %v655, 7
    %v657 = vsub.s32 0, %v656
    %v658 = vrot.slane %v653, %v657
    %v660 = vadd.f32 %v591, %v658
    %v661 = vadd.f32 %v594, %v658
    %v662 = vadd.f32 %v599, %v658
    %v663 = vadd.f32 %v602, %v658
    %v664 = vadd.f32 %v607, %v658
    %v665 = vadd.f32 %v610, %v658
    %v666 = vadd.f32 %v615, %v658
    %v667 = vadd.f32 %v618, %v658
    %v668 = vadd.f32 %v623, %v658
    %v669 = vadd.f32 %v626, %v658
    %v670 = vadd.f32 %v631, %v658
    %v671 = vadd.f32 %v634, %v658
    %v672 = vadd.f32 %v639, %v658
    %v673 = vadd.f32 %v642, %v658
    %v674 = vadd.f32 %v647, %v658
    %v675 = vadd.f32 %v650, %v658
    %v676 = vmax.f32 %v660, 0.0
    %v677 = vmax.f32 %v661, 0.0
    %v678 = vmax.f32 %v662, 0.0
    %v679 = vmax.f32 %v663, 0.0
    %v680 = vmax.f32 %v664, 0.0
    %v681 = vmax.f32 %v665, 0.0
    %v682 = vmax.f32 %v666, 0.0
    %v683 = vmax.f32 %v667, 0.0
    %v684 = vmax.f32 %v668, 0.0
    %v685 = vmax.f32 %v669, 0.0
    %v686 = vmax.f32 %v670, 0.0
    %v687 = vmax.f32 %v671, 0.0
    %v688 = vmax.f32 %v672, 0.0
    %v689 = vmax.f32 %v673, 0.0
    %v690 = vmax.f32 %v674, 0.0
    %v691 = vmax.f32 %v675, 0.0
    %v692 = vpack.c.bf16 %v677, %v676
    %v693 = vpack.c.bf16 %v679, %v678
    %v694 = vpack.c.bf16 %v681, %v680
    %v695 = vpack.c.bf16 %v683, %v682
    %v696 = vpack.c.bf16 %v685, %v684
    %v697 = vpack.c.bf16 %v687, %v686
    %v698 = vpack.c.bf16 %v689, %v688
    %v699 = vpack.c.bf16 %v691, %v690
    %v708 = vunpack.c.l.b16 %v692
    %v709 = vunpack.c.h.b16 %v692
    %v710 = vunpack.c.l.b16 %v693
    %v711 = vunpack.c.h.b16 %v693
    %v712 = vunpack.c.l.b16 %v694
    %v713 = vunpack.c.h.b16 %v694
    %v714 = vunpack.c.l.b16 %v695
    %v715 = vunpack.c.h.b16 %v695
    %v716 = vunpack.c.l.b16 %v696
    %v717 = vunpack.c.h.b16 %v696
    %v718 = vunpack.c.l.b16 %v697
    %v719 = vunpack.c.h.b16 %v697
    %v720 = vunpack.c.l.b16 %v698
    %v721 = vunpack.c.h.b16 %v698
    %v722 = vunpack.c.l.b16 %v699
    %v723 = vunpack.c.h.b16 %v699
    %v724 = vpack.c.b16 %v708, %v708
    %v725 = vpack.c.b16 %v709, %v709
    %v726 = vpack.c.b16 %v710, %v710
    %v727 = vpack.c.b16 %v711, %v711
    %v728 = vpack.c.b16 %v712, %v712
    %v729 = vpack.c.b16 %v713, %v713
    %v730 = vpack.c.b16 %v714, %v714
    %v731 = vpack.c.b16 %v715, %v715
    %v732 = vpack.c.b16 %v716, %v716
    %v733 = vpack.c.b16 %v717, %v717
    %v734 = vpack.c.b16 %v718, %v718
    %v735 = vpack.c.b16 %v719, %v719
    %v736 = vpack.c.b16 %v720, %v720
    %v737 = vpack.c.b16 %v721, %v721
    %v738 = vpack.c.b16 %v722, %v722
    %v739 = vpack.c.b16 %v723, %v723
    %vm756 = vcmask 257024
    %757 = vst.msk [vmem:[%s6] sm:$0xf] %vm756, %v724
    %758 = vst.msk [vmem:[%s6 + $0x4] sm:$0xf] %vm756, %v725
    %759 = vst.msk [vmem:[%s6 + $0x8] sm:$0xf] %vm756, %v726
    %760 = vst.msk [vmem:[%s6 + $0xc] sm:$0xf] %vm756, %v727
    %761 = vst.msk [vmem:[%s6 + $0x10] sm:$0xf] %vm756, %v728
    %762 = vst.msk [vmem:[%s6 + $0x14] sm:$0xf] %vm756, %v729
    %763 = vst.msk [vmem:[%s6 + $0x18] sm:$0xf] %vm756, %v730
    %764 = vst.msk [vmem:[%s6 + $0x1c] sm:$0xf] %vm756, %v731
    %765 = vst.msk [vmem:[%s6 + $0x20] sm:$0xf] %vm756, %v732
    %766 = vst.msk [vmem:[%s6 + $0x24] sm:$0xf] %vm756, %v733
    %767 = vst.msk [vmem:[%s6 + $0x28] sm:$0xf] %vm756, %v734
    %768 = vst.msk [vmem:[%s6 + $0x2c] sm:$0xf] %vm756, %v735
    %769 = vst.msk [vmem:[%s6 + $0x30] sm:$0xf] %vm756, %v736
    %770 = vst.msk [vmem:[%s6 + $0x34] sm:$0xf] %vm756, %v737
    %771 = vst.msk [vmem:[%s6 + $0x38] sm:$0xf] %vm756, %v738
    %772 = vst.msk [vmem:[%s6 + $0x3c] sm:$0xf] %vm756, %v739
  $region33: #{tpu_custom_call.1} parent=0 // pred_fallthru
    _
  // Predicated region
  $region34: #{tpu_custom_call.1} parent=0 // pred_check
    _
  $region35: #{tpu_custom_call.1} parent=0 // pred_check_branch
    %774 = sbr.rel (0) target = $region37
  $region36: #{tpu_custom_call.1} parent=0 // pred_region
    _
  $region37: #{tpu_custom_call.1} parent=0 // pred_fallthru
    _
  // Predicated region
  $region38: #{tpu_custom_call.1} parent=0 // pred_check
    _
  $region39: #{tpu_custom_call.1} parent=0 // pred_check_branch
    %776 = sbr.rel (0) target = $region41
  $region40: #{tpu_custom_call.1} parent=0 // pred_region
    _
  $region41: #{tpu_custom_call.1} parent=0 // pred_fallthru
    _

</llo_original>
